<compile_context>
chip_gen: v6e
topology: v6e:2x2x1
jax: 0.10.0
libtpu: 0.0.40
codegen_flags: <defaults>
</compile_context>

<pallas_src>
import functools

import jax
import jax.numpy as jnp
from jax.experimental import pallas as pl
from jax.experimental.pallas import tpu as pltpu


NUM_CORES = 2      # leading 'parallel' grid axis (uses both TCs on v7x)
TILE_N_MAX = 512   # rows per tile; ~512*128*4B buffers fit every VMEM budget


def _round_up(a: int, b: int) -> int:
    return (a + b - 1) // b * b


def focal_loss_kernel(x_ref, tgt_ref, w_ref, num_ref, den_ref, *,
                      gamma, eps, ignore_index):
    """x_ref: (TILE_N, C) f32 logits, tgt_ref: (TILE_N, 1) i32 labels,
    w_ref: (1, C) f32 class weights.
    num_ref/den_ref: (1, 1, 1) f32 per-core partial sums (accumulators)."""
    i = pl.program_id(1)

    @pl.when(i == 0)
    def _():
        num_ref[...] = jnp.zeros_like(num_ref)
        den_ref[...] = jnp.zeros_like(den_ref)

    x = x_ref[...]                     # (TILE_N, C)
    tgt = tgt_ref[...]                 # (TILE_N, 1)
    cw = w_ref[...]                    # (1, C)
    n, c = x.shape

    # mask = (target == ignore_index); padded rows carry ignore_index too.
    valid = tgt != ignore_index                              # (TILE_N, 1)
    valid_f = valid.astype(jnp.float32)
    tgt_c = jnp.where(valid, tgt, 0)

    class_ids = jax.lax.broadcasted_iota(jnp.int32, (n, c), 1)
    onehot = (class_ids == tgt_c).astype(jnp.float32)        # (TILE_N, C)

    # pt via one-hot gather + log-sum-exp (no materialized softmax / divide).
    m = jnp.max(x, axis=-1, keepdims=True)                   # (TILE_N, 1)
    lse = jnp.log(jnp.sum(jnp.exp(x - m), axis=-1, keepdims=True))
    x_t = jnp.sum(onehot * x, axis=-1, keepdims=True)        # gathered logit
    log_pt = (x_t - m) - lse                                  # log softmax[t]
    pt = jnp.exp(log_pt) * valid_f                            # == p * ~mask

    focal = 1.0 - pt
    nll = jnp.where(valid, -jnp.log(eps + pt), 0.0)           # masked_fill

    # per-sample class weight = (onehot * weights).sum(-1)
    w_row = jnp.sum(onehot * cw, axis=-1, keepdims=True)      # (TILE_N, 1)

    # focal ** gamma, specialized for integer gamma (avoids exp/log pow).
    g = float(gamma)
    if g.is_integer() and 0 <= g <= 8:
        gi = int(g)
        if gi == 0:
            fp = jnp.ones_like(focal)
        else:
            fp = focal
            for _ in range(gi - 1):
                fp = fp * focal
    else:
        fp = jnp.power(focal, gamma)

    loss = w_row * fp * nll                                   # (TILE_N, 1)

    # Partial sums for the 'mean' reduction: sum(loss) / sum(~mask * weights)
    num_ref[...] = num_ref[...] + jnp.sum(loss)
    den_ref[...] = den_ref[...] + jnp.sum(valid_f * w_row)


def focal_loss(x, target, class_weights=None, *, gamma=2.0, eps=1e-16,
               ignore_index=-100):
    """x: (..., C) float logits, target: (...) int labels,
    class_weights: (C,) or None. Returns the scalar 'mean' focal loss."""
    C = x.shape[-1]
    x2 = x.reshape(-1, C).astype(jnp.float32)
    tgt2 = target.reshape(-1, 1).astype(jnp.int32)
    if class_weights is None:
        w2 = jnp.ones((1, C), dtype=jnp.float32)
    else:
        w2 = class_weights.reshape(1, C).astype(jnp.float32)
    N = x2.shape[0]

    # Tile over N; pad so each core gets an integer number of full tiles.
    tile_n = min(TILE_N_MAX, _round_up(max(N, 1), 8))
    n_pad = _round_up(max(N, 1), NUM_CORES * tile_n)
    n_tiles_per_core = n_pad // (NUM_CORES * tile_n)
    pad_rows = n_pad - N
    if pad_rows:
        x2 = jnp.pad(x2, ((0, pad_rows), (0, 0)))
        # Padded rows get ignore_index -> contribute 0 to both num and den.
        tgt2 = jnp.pad(tgt2, ((0, pad_rows), (0, 0)),
                       constant_values=ignore_index)

    kernel = functools.partial(
        focal_loss_kernel, gamma=gamma, eps=eps, ignore_index=ignore_index
    )

    def row_map(c, i):
        return (c * n_tiles_per_core + i, 0)

    num_parts, den_parts = pl.pallas_call(
        kernel,
        out_shape=(
            jax.ShapeDtypeStruct((NUM_CORES, 1, 1), jnp.float32),
            jax.ShapeDtypeStruct((NUM_CORES, 1, 1), jnp.float32),
        ),
        grid=(NUM_CORES, n_tiles_per_core),
        in_specs=[
            pl.BlockSpec((tile_n, C), row_map),
            pl.BlockSpec((tile_n, 1), row_map),
            pl.BlockSpec((1, C), lambda c, i: (0, 0)),   # weights stay resident
        ],
        out_specs=(
            pl.BlockSpec((1, 1, 1), lambda c, i: (c, 0, 0)),
            pl.BlockSpec((1, 1, 1), lambda c, i: (c, 0, 0)),
        ),
        compiler_params=pltpu.CompilerParams(
            dimension_semantics=("parallel", "arbitrary")),
    )(x2, tgt2, w2)

    # Final 'mean' reduction epilogue (tiny, done in plain JAX).
    return jnp.sum(num_parts) / jnp.sum(den_parts)


def focal_loss_reference(x, target, class_weights, *, gamma=2.0, eps=1e-16,
                         ignore_index=-100):
    """Plain-JAX transcription of the PyTorch forward (reduction='mean')."""
    C = x.shape[-1]
    probs = jax.nn.softmax(x.reshape(-1, C).astype(jnp.float32), axis=-1)
    tgt = target.reshape(-1)
    mask = tgt == ignore_index
    tgt_c = jnp.where(mask, 0, tgt)
    onehot = jax.nn.one_hot(tgt_c, C, dtype=jnp.float32)
    weights = jnp.sum(onehot * class_weights[None, :], axis=-1)
    pt = jnp.sum(onehot * probs, axis=-1) * (~mask)
    focal = 1.0 - pt
    nll = jnp.where(mask, 0.0, -jnp.log(eps + pt))
    loss = weights * focal ** gamma * nll
    return jnp.sum(loss) / jnp.sum((~mask) * weights)


if __name__ == "__main__":
    key = jax.random.PRNGKey(0)
    gamma = 2.0

    # --- small case (single tile per core, padded rows on core 1) ----------
    kx, kt = jax.random.split(key)
    B, S, C = 2, 8, 16
    x = jax.random.normal(kx, (B, S, C), dtype=jnp.float32)
    target = jax.random.randint(kt, (B, S), 0, C, dtype=jnp.int32)
    target = target.at[0, 3].set(-100)
    target = target.at[1, 5].set(-100)
    class_weights = jnp.linspace(0.5, 1.5, C, dtype=jnp.float32)

    out = jax.block_until_ready(focal_loss(x, target, class_weights, gamma=gamma))
    ref = focal_loss_reference(x, target, class_weights, gamma=gamma)
    assert jnp.allclose(out, ref, rtol=1e-5, atol=1e-6), (out, ref)

    # --- larger case (multiple grid steps per core + ragged padding) -------
    kx2, kt2 = jax.random.split(jax.random.PRNGKey(1))
    N2, C2 = 2061, 16
    x_big = jax.random.normal(kx2, (N2, C2), dtype=jnp.float32)
    tgt_big = jax.random.randint(kt2, (N2,), 0, C2, dtype=jnp.int32)
    tgt_big = tgt_big.at[7].set(-100)
    tgt_big = tgt_big.at[1500].set(-100)
    cw2 = jnp.linspace(0.25, 2.0, C2, dtype=jnp.float32)

    out2 = jax.block_until_ready(focal_loss(x_big, tgt_big, cw2, gamma=gamma))
    ref2 = focal_loss_reference(x_big, tgt_big, cw2, gamma=gamma)
    assert jnp.allclose(out2, ref2, rtol=1e-5, atol=1e-6), (out2, ref2)

    print("KERNEL_OK")
</pallas_src>

<mosaic_0001>
module attributes {stable_mosaic.version = 11 : i64} {
  func.func @focal_loss_kernel(%arg0: i32, %arg1: i32, %arg2: memref<16x16xf32, #tpu.memory_space<vmem>>, %arg3: memref<16x1xi32, #tpu.memory_space<vmem>>, %arg4: memref<1x16xf32, #tpu.memory_space<vmem>>, %arg5: memref<1x1x1xf32, #tpu.memory_space<vmem>>, %arg6: memref<1x1x1xf32, #tpu.memory_space<vmem>>) attributes {dimension_semantics = [#tpu.dimension_semantics<parallel>, #tpu.dimension_semantics<arbitrary>], iteration_bounds = array<i64: 2, 1>, scalar_prefetch = 0 : i64, scratch_operands = 0 : i64, tpu.core_type = #tpu.core_type<tc>, window_params = [{transform_indices = @transform_0, window_bounds = array<i64: 16, 16>}, {transform_indices = @transform_1, window_bounds = array<i64: 16, 1>}, {pipeline_mode = #tpu.pipeline_mode<synchronous>, transform_indices = @transform_2, window_bounds = array<i64: 1, 16>}, {transform_indices = @transform_3, window_bounds = array<i64: 1, 1, 1>}, {transform_indices = @transform_4, window_bounds = array<i64: 1, 1, 1>}]} {
    %c0_i32 = arith.constant 0 : i32
    %0 = arith.cmpi eq, %arg1, %c0_i32 : i32
    %1 = arith.extui %0 : i1 to i32
    %c0_i32_0 = arith.constant 0 : i32
    %2 = arith.cmpi ne, %1, %c0_i32_0 : i32
    scf.if %2 {
      %cst_28 = arith.constant 0.000000e+00 : f32
      %65 = vector.broadcast %cst_28 : f32 to vector<1x1x1xf32>
      %c0_29 = arith.constant 0 : index
      %c0_30 = arith.constant 0 : index
      %c0_31 = arith.constant 0 : index
      %66 = vector.load %arg5[%c0_29, %c0_30, %c0_31] : memref<1x1x1xf32, #tpu.memory_space<vmem>>, vector<1x1x1xf32>
      tpu.vector_store %arg5[%c0_29, %c0_30, %c0_31], %65 {strides = array<i32>} : memref<1x1x1xf32, #tpu.memory_space<vmem>>, vector<1x1x1xf32>,
      %cst_32 = arith.constant 0.000000e+00 : f32
      %67 = vector.broadcast %cst_32 : f32 to vector<1x1x1xf32>
      %c0_33 = arith.constant 0 : index
      %c0_34 = arith.constant 0 : index
      %c0_35 = arith.constant 0 : index
      %68 = vector.load %arg6[%c0_33, %c0_34, %c0_35] : memref<1x1x1xf32, #tpu.memory_space<vmem>>, vector<1x1x1xf32>
      tpu.vector_store %arg6[%c0_33, %c0_34, %c0_35], %67 {strides = array<i32>} : memref<1x1x1xf32, #tpu.memory_space<vmem>>, vector<1x1x1xf32>,
    } else {
    }
    %c0 = arith.constant 0 : index
    %c0_1 = arith.constant 0 : index
    %3 = vector.load %arg2[%c0, %c0_1] : memref<16x16xf32, #tpu.memory_space<vmem>>, vector<16x16xf32>
    %c0_2 = arith.constant 0 : index
    %c0_3 = arith.constant 0 : index
    %4 = vector.load %arg3[%c0_2, %c0_3] : memref<16x1xi32, #tpu.memory_space<vmem>>, vector<16x1xi32>
    %c0_4 = arith.constant 0 : index
    %c0_5 = arith.constant 0 : index
    %5 = vector.load %arg4[%c0_4, %c0_5] : memref<1x16xf32, #tpu.memory_space<vmem>>, vector<1x16xf32>
    %c-100_i32 = arith.constant -100 : i32
    %6 = vector.broadcast %c-100_i32 : i32 to vector<16x1xi32>
    %7 = arith.cmpi ne, %4, %6 : vector<16x1xi32>
    %8 = arith.extui %7 : vector<16x1xi1> to vector<16x1xi32>
    %9 = arith.sitofp %8 : vector<16x1xi32> to vector<16x1xf32>
    %c0_i32_6 = arith.constant 0 : i32
    %10 = vector.broadcast %c0_i32_6 : i32 to vector<16x1xi32>
    %11 = arith.select %7, %4, %10 : vector<16x1xi1>, vector<16x1xi32>
    %12 = tpu.iota {dimensions = array<i32: 1>} : vector<16x16xi32>
    %13 = vector.broadcast %11 : vector<16x1xi32> to vector<16x16xi32>
    %14 = arith.cmpi eq, %12, %13 : vector<16x16xi32>
    %15 = arith.extui %14 : vector<16x16xi1> to vector<16x16xi32>
    %16 = arith.sitofp %15 : vector<16x16xi32> to vector<16x16xf32>
    %cst = arith.constant dense<0xFF800000> : vector<16xf32>
    %17 = vector.multi_reduction <maximumf>, %3, %cst [1] : vector<16x16xf32> to vector<16xf32>
    %18 = vector.shape_cast %17 : vector<16xf32> to vector<16x1xf32>
    %19 = vector.broadcast %18 : vector<16x1xf32> to vector<16x16xf32>
    %20 = arith.subf %3, %19 : vector<16x16xf32>
    %21 = math.exp %20 : vector<16x16xf32>
    %cst_7 = arith.constant dense<0.000000e+00> : vector<16xf32>
    %22 = vector.multi_reduction <add>, %21, %cst_7 [1] : vector<16x16xf32> to vector<16xf32>
    %23 = vector.shape_cast %22 : vector<16xf32> to vector<16x1xf32>
    %24 = math.log %23 : vector<16x1xf32>
    %25 = arith.mulf %16, %3 : vector<16x16xf32>
    %cst_8 = arith.constant dense<0.000000e+00> : vector<16xf32>
    %26 = vector.multi_reduction <add>, %25, %cst_8 [1] : vector<16x16xf32> to vector<16xf32>
    %27 = vector.shape_cast %26 : vector<16xf32> to vector<16x1xf32>
    %28 = arith.subf %27, %18 : vector<16x1xf32>
    %29 = arith.subf %28, %24 : vector<16x1xf32>
    %30 = math.exp %29 : vector<16x1xf32>
    %31 = arith.mulf %30, %9 : vector<16x1xf32>
    %cst_9 = arith.constant 1.000000e+00 : f32
    %32 = vector.broadcast %cst_9 : f32 to vector<16x1xf32>
    %33 = arith.subf %32, %31 : vector<16x1xf32>
    %cst_10 = arith.constant 1.000000e-16 : f32
    %34 = vector.broadcast %cst_10 : f32 to vector<16x1xf32>
    %35 = arith.addf %34, %31 : vector<16x1xf32>
    %36 = math.log %35 : vector<16x1xf32>
    %cst_11 = arith.constant 0.000000e+00 : f32
    %37 = vector.broadcast %cst_11 : f32 to vector<16x1xf32>
    %38 = arith.subf %37, %36 : vector<16x1xf32>
    %cst_12 = arith.constant 0.000000e+00 : f32
    %39 = vector.broadcast %cst_12 : f32 to vector<16x1xf32>
    %40 = arith.select %7, %38, %39 : vector<16x1xi1>, vector<16x1xf32>
    %41 = vector.broadcast %5 : vector<1x16xf32> to vector<16x16xf32>
    %42 = arith.mulf %16, %41 : vector<16x16xf32>
    %cst_13 = arith.constant dense<0.000000e+00> : vector<16xf32>
    %43 = vector.multi_reduction <add>, %42, %cst_13 [1] : vector<16x16xf32> to vector<16xf32>
    %44 = vector.shape_cast %43 : vector<16xf32> to vector<16x1xf32>
    %45 = arith.mulf %33, %33 : vector<16x1xf32>
    %46 = arith.mulf %44, %45 : vector<16x1xf32>
    %47 = arith.mulf %46, %40 : vector<16x1xf32>
    %c0_14 = arith.constant 0 : index
    %c0_15 = arith.constant 0 : index
    %c0_16 = arith.constant 0 : index
    %48 = vector.load %arg5[%c0_14, %c0_15, %c0_16] : memref<1x1x1xf32, #tpu.memory_space<vmem>>, vector<1x1x1xf32>
    %49 = vector.shape_cast %47 : vector<16x1xf32> to vector<1x16x1xf32>
    %cst_17 = arith.constant dense<0.000000e+00> : vector<1xf32>
    %50 = vector.multi_reduction <add>, %49, %cst_17 [1, 2] : vector<1x16x1xf32> to vector<1xf32>
    %51 = vector.shape_cast %50 : vector<1xf32> to vector<1x1x1xf32>
    %52 = vector.extract %51[0, 0, 0] : f32 from vector<1x1x1xf32>
    %53 = vector.broadcast %52 : f32 to vector<1x1x1xf32>
    %54 = arith.addf %48, %53 : vector<1x1x1xf32>
    %c0_18 = arith.constant 0 : index
    %c0_19 = arith.constant 0 : index
    %c0_20 = arith.constant 0 : index
    %55 = vector.load %arg5[%c0_18, %c0_19, %c0_20] : memref<1x1x1xf32, #tpu.memory_space<vmem>>, vector<1x1x1xf32>
    tpu.vector_store %arg5[%c0_18, %c0_19, %c0_20], %54 {strides = array<i32>} : memref<1x1x1xf32, #tpu.memory_space<vmem>>, vector<1x1x1xf32>,
    %c0_21 = arith.constant 0 : index
    %c0_22 = arith.constant 0 : index
    %c0_23 = arith.constant 0 : index
    %56 = vector.load %arg6[%c0_21, %c0_22, %c0_23] : memref<1x1x1xf32, #tpu.memory_space<vmem>>, vector<1x1x1xf32>
    %57 = arith.mulf %9, %44 : vector<16x1xf32>
    %58 = vector.shape_cast %57 : vector<16x1xf32> to vector<1x16x1xf32>
    %cst_24 = arith.constant dense<0.000000e+00> : vector<1xf32>
    %59 = vector.multi_reduction <add>, %58, %cst_24 [1, 2] : vector<1x16x1xf32> to vector<1xf32>
    %60 = vector.shape_cast %59 : vector<1xf32> to vector<1x1x1xf32>
    %61 = vector.extract %60[0, 0, 0] : f32 from vector<1x1x1xf32>
    %62 = vector.broadcast %61 : f32 to vector<1x1x1xf32>
    %63 = arith.addf %56, %62 : vector<1x1x1xf32>
    %c0_25 = arith.constant 0 : index
    %c0_26 = arith.constant 0 : index
    %c0_27 = arith.constant 0 : index
    %64 = vector.load %arg6[%c0_25, %c0_26, %c0_27] : memref<1x1x1xf32, #tpu.memory_space<vmem>>, vector<1x1x1xf32>
    tpu.vector_store %arg6[%c0_25, %c0_26, %c0_27], %63 {strides = array<i32>} : memref<1x1x1xf32, #tpu.memory_space<vmem>>, vector<1x1x1xf32>,
    return
  }
  func.func @transform_0(%arg0: i32, %arg1: i32) -> (i32, i32) {
    %c1_i32 = arith.constant 1 : i32
    %0 = arith.muli %arg0, %c1_i32 : i32
    %1 = arith.addi %0, %arg1 : i32
    %c0_i32 = arith.constant 0 : i32
    %c0_i32_0 = arith.constant 0 : i32
    return %1, %c0_i32 : i32, i32
  }
  func.func @transform_1(%arg0: i32, %arg1: i32) -> (i32, i32) {
    %c1_i32 = arith.constant 1 : i32
    %0 = arith.muli %arg0, %c1_i32 : i32
    %1 = arith.addi %0, %arg1 : i32
    %c0_i32 = arith.constant 0 : i32
    %c0_i32_0 = arith.constant 0 : i32
    return %1, %c0_i32 : i32, i32
  }
  func.func @transform_2(%arg0: i32, %arg1: i32) -> (i32, i32) {
    %c0_i32 = arith.constant 0 : i32
    %c0_i32_0 = arith.constant 0 : i32
    %c0_i32_1 = arith.constant 0 : i32
    return %c0_i32, %c0_i32_0 : i32, i32
  }
  func.func @transform_3(%arg0: i32, %arg1: i32) -> (i32, i32, i32) {
    %c0_i32 = arith.constant 0 : i32
    %c0_i32_0 = arith.constant 0 : i32
    %c0_i32_1 = arith.constant 0 : i32
    return %arg0, %c0_i32, %c0_i32_0 : i32, i32, i32
  }
  func.func @transform_4(%arg0: i32, %arg1: i32) -> (i32, i32, i32) {
    %c0_i32 = arith.constant 0 : i32
    %c0_i32_0 = arith.constant 0 : i32
    %c0_i32_1 = arith.constant 0 : i32
    return %arg0, %c0_i32, %c0_i32_0 : i32, i32, i32
  }
}

</mosaic_0001>

<llo_original>
// kernel: tpu_custom_call.1
$region0: #{tpu_custom_call.1}
  #allocation0 [shape = 'u32[]', space=smem, size = 0x4, offset = 0x4, fixed_abs, tag = 'smem constant byte address 0x4 - core index']
  #allocation1 [shape = 'u32[144,128]{1,0:T(1,128)}', space=vmem, size = 0x12000, scoped, tag = 'internal scratch']
  %s0 = inlined_call_operand.vmem [shape: f32[32,16], index: 0, kind: input, shape index: {}]
  %s1 = inlined_call_operand.vmem [shape: s32[32,1], index: 1, kind: input, shape index: {}]
  %s2 = inlined_call_operand.vmem [shape: f32[1,16], index: 2, kind: input, shape index: {}]
  %s3 = inlined_call_operand.vmem [shape: f32[2,1,1], index: 3, kind: output, shape index: {0}]
  %s4 = inlined_call_operand.vmem [shape: f32[2,1,1], index: 4, kind: output, shape index: {1}]
  %5 = xla_tuple %s3, %s4
  %s6 = sld [smem:[#allocation0]]
  $region57: #{tpu_custom_call.1} parent=0
    _
  %s8 = ssub.s32 1, %s6
  %s9 = scalar_select 0, %s8, %s6
  loop: start=0, step=1, limit=4
  $region2: #{tpu_custom_call.1} parent=0 // loop_pre_header
    _
  $region3: #{tpu_custom_call.1} parent=0 // loop_header
    %s11 = sphi 0, %s15
    %p12 = scmp.ge.s32.totalorder %s11, 4
    %s18 = sphi 0, %s30
    %s19 = sphi 0, %s26
    %s20 = sphi 0, %s18
    %s21 = sphi 0, %s19
    %s22 = sphi 0, %s20
    %s23 = sphi 0, %s21
    %s35 = sphi 0, %s37
    %s38 = sphi 0, %s35
    %s39 = sphi 0, %s38
    %s55 = sphi 0, %s39
    %s63 = sphi 0, %s65
    %s66 = sphi 0, %s63
    %s67 = sphi 0, %s66
    %s83 = sphi 0, %s67
    %s87 = sphi 0, %s87
    %s89 = sphi 0, %s87
    %s90 = sphi 0, %s89
    %s104 = sphi 0, %s90
    %s110 = sphi 0, %s112
    %s113 = sphi 0, %s110
    %s114 = sphi 0, %s113
    %s130 = sphi 0, %s114
    %s136 = sphi 0, %s138
    %s139 = sphi 0, %s136
    %s140 = sphi 0, %s139
    %s156 = sphi 0, %s140
  $region4: #{tpu_custom_call.1} parent=0 // loop_header_branch
    %14 = sbr.rel (%p12) target = $region8
  $region5: #{tpu_custom_call.1} parent=0 // loop_body
    %s16 = ssub.s32 %s11, 1
    %s17 = ssub.s32 %s11, 2
    %s24 = sadd.s32 1, %s19
    %p25 = scmp.ge.s32.totalorder %s24, 1
    %s26 = scalar_select %p25, 0, %s24
    %s27 = sadd.s32 1, %s18
    %s28 = scalar_select %p25, %s27, %s18
    %p29 = scmp.ge.s32.totalorder %s28, 2
    %s30 = scalar_select %p29, 0, %s28
    %s31 = sadd.s32 %s18, %s19
    %s32 = sadd.s32 %s30, %s26
    %s33 = ssub.s32 %s31, %s32
    %p34 = scmp.eq.s32.totalorder %s33, 0
    %s36 = sadd.s32 %s35, 1
    %s37 = scalar_select %p34, %s35, %s36
    %p40 = pneg %p34
    %p41 = scmp.eq.s32.totalorder %s11, 1
    %p42 = por %p40, %p41
    %p43 = scmp.ne.s32.totalorder %s35, %s38
    %p44 = scmp.eq.s32.totalorder %s11, 0
    %p45 = por %p43, %p44
    %p46 = scmp.ne.s32.totalorder %s35, %s38
    %p47 = scmp.eq.s32.totalorder %s16, 1
    %p48 = por %p46, %p47
    %p49 = scmp.ne.s32.totalorder %s38, %s39
    %p50 = scmp.eq.s32.totalorder %s16, 0
    %p51 = por %p49, %p50
    %p52 = scmp.ne.s32.totalorder %s38, %s39
    %p53 = scmp.eq.s32.totalorder %s17, 1
    %p54 = por %p52, %p53
    %p56 = scmp.ne.s32.totalorder %s39, %s55
    %p57 = scmp.eq.s32.totalorder %s17, 0
    %p58 = por %p56, %p57
    %s59 = sadd.s32 %s18, %s19
    %s60 = sadd.s32 %s30, %s26
    %s61 = ssub.s32 %s59, %s60
    %p62 = scmp.eq.s32.totalorder %s61, 0
    %s64 = sadd.s32 %s63, 1
    %s65 = scalar_select %p62, %s63, %s64
    %p68 = pneg %p62
    %p69 = scmp.eq.s32.totalorder %s11, 1
    %p70 = por %p68, %p69
    %p71 = scmp.ne.s32.totalorder %s63, %s66
    %p72 = scmp.eq.s32.totalorder %s11, 0
    %p73 = por %p71, %p72
    %p74 = scmp.ne.s32.totalorder %s63, %s66
    %p75 = scmp.eq.s32.totalorder %s16, 1
    %p76 = por %p74, %p75
    %p77 = scmp.ne.s32.totalorder %s66, %s67
    %p78 = scmp.eq.s32.totalorder %s16, 0
    %p79 = por %p77, %p78
    %p80 = scmp.ne.s32.totalorder %s66, %s67
    %p81 = scmp.eq.s32.totalorder %s17, 1
    %p82 = por %p80, %p81
    %p84 = scmp.ne.s32.totalorder %s67, %s83
    %p85 = scmp.eq.s32.totalorder %s17, 0
    %p86 = por %p84, %p85
    %s88 = sadd.s32 %s87, 1
    %p91 = scmp.eq.s32.totalorder %s11, 1
    %p92 = scmp.ne.s32.totalorder %s87, %s89
    %p93 = scmp.eq.s32.totalorder %s11, 0
    %p94 = por %p92, %p93
    %p95 = scmp.ne.s32.totalorder %s87, %s89
    %p96 = scmp.eq.s32.totalorder %s16, 1
    %p97 = por %p95, %p96
    %p98 = scmp.ne.s32.totalorder %s89, %s90
    %p99 = scmp.eq.s32.totalorder %s16, 0
    %p100 = por %p98, %p99
    %p101 = scmp.ne.s32.totalorder %s89, %s90
    %p102 = scmp.eq.s32.totalorder %s17, 1
    %p103 = por %p101, %p102
    %p105 = scmp.ne.s32.totalorder %s90, %s104
    %p106 = scmp.eq.s32.totalorder %s17, 0
    %p107 = por %p105, %p106
    %s108 = ssub.s32 %s18, %s30
    %p109 = scmp.eq.s32.totalorder %s108, 0
    %s111 = sadd.s32 %s110, 1
    %s112 = scalar_select %p109, %s110, %s111
    %p115 = pneg %p109
    %p116 = scmp.eq.s32.totalorder %s11, 1
    %p117 = por %p115, %p116
    %p118 = scmp.ne.s32.totalorder %s110, %s113
    %p119 = scmp.eq.s32.totalorder %s11, 0
    %p120 = por %p118, %p119
    %p121 = scmp.ne.s32.totalorder %s110, %s113
    %p122 = scmp.eq.s32.totalorder %s16, 1
    %p123 = por %p121, %p122
    %p124 = scmp.ne.s32.totalorder %s113, %s114
    %p125 = scmp.eq.s32.totalorder %s16, 0
    %p126 = por %p124, %p125
    %p127 = scmp.ne.s32.totalorder %s113, %s114
    %p128 = scmp.eq.s32.totalorder %s17, 1
    %p129 = por %p127, %p128
    %p131 = scmp.ne.s32.totalorder %s114, %s130
    %p132 = scmp.eq.s32.totalorder %s17, 0
    %p133 = por %p131, %p132
    %s134 = ssub.s32 %s18, %s30
    %p135 = scmp.eq.s32.totalorder %s134, 0
    %s137 = sadd.s32 %s136, 1
    %s138 = scalar_select %p135, %s136, %s137
    %p141 = pneg %p135
    %p142 = scmp.eq.s32.totalorder %s11, 1
    %p143 = por %p141, %p142
    %p144 = scmp.ne.s32.totalorder %s136, %s139
    %p145 = scmp.eq.s32.totalorder %s11, 0
    %p146 = por %p144, %p145
    %p147 = scmp.ne.s32.totalorder %s136, %s139
    %p148 = scmp.eq.s32.totalorder %s16, 1
    %p149 = por %p147, %p148
    %p150 = scmp.ne.s32.totalorder %s139, %s140
    %p151 = scmp.eq.s32.totalorder %s16, 0
    %p152 = por %p150, %p151
    %p153 = scmp.ne.s32.totalorder %s139, %s140
    %p154 = scmp.eq.s32.totalorder %s17, 1
    %p155 = por %p153, %p154
    %p157 = scmp.ne.s32.totalorder %s140, %s156
    %p158 = scmp.eq.s32.totalorder %s17, 0
    %p159 = por %p157, %p158
    %p160 = scmp.le.s32.totalorder 1, %s11
    %p161 = scmp.lt.s32.totalorder %s11, 3
    %p162 = pnand %p160, %p161
    %p163 = pneg %p162
    // Predicated region
    $region9: #{tpu_custom_call.1} parent=5 // pred_check
      _
    $region10: #{tpu_custom_call.1} parent=5 // pred_check_branch
      %165 = sbr.rel (%p162) target = $region12
    $region11: #{tpu_custom_call.1} parent=5 // pred_region
      %s166 = ssub.s32 %s11, 1
      // Predicated region
      $region13: #{tpu_custom_call.1} parent=11 // pred_check
        %p167 = pneg %p100
      $region14: #{tpu_custom_call.1} parent=11 // pred_check_branch
        %169 = sbr.rel (%p167) target = $region16
      $region15: #{tpu_custom_call.1} parent=11 // pred_region
        _
      $region16: #{tpu_custom_call.1} parent=11 // pred_fallthru
        _
    $region12: #{tpu_custom_call.1} parent=5 // pred_fallthru
      _
    %p170 = scmp.lt.s32.totalorder %s11, 2
    // Predicated region
    $region17: #{tpu_custom_call.1} parent=5 // pred_check
      %p171 = pneg %p170
    $region18: #{tpu_custom_call.1} parent=5 // pred_check_branch
      %173 = sbr.rel (%p171) target = $region20
    $region19: #{tpu_custom_call.1} parent=5 // pred_region
      // Predicated region
      $region21: #{tpu_custom_call.1} parent=19 // pred_check
        %p174 = pneg %p45
      $region22: #{tpu_custom_call.1} parent=19 // pred_check_branch
        %176 = sbr.rel (%p174) target = $region24
      $region23: #{tpu_custom_call.1} parent=19 // pred_region
        %s177 = sadd.s32 %s18, %s19
        %s178 = smul.u32 2, %s177
        %p179 = scmp.lt.s32.totalorder %s178, 3
        %s180 = scalar_select %p179, %s178, 3
        %s181 = smul.addr %s180, 8
        %s182 = scalar_lea.vmem %s0, %s181
        %s183 = sadd.s32 %s18, %s19
        %s184 = smul.u32 2, %s183
      $region24: #{tpu_custom_call.1} parent=19 // pred_fallthru
        _
      // Predicated region
      $region25: #{tpu_custom_call.1} parent=19 // pred_check
        %p185 = pneg %p73
      $region26: #{tpu_custom_call.1} parent=19 // pred_check_branch
        %187 = sbr.rel (%p185) target = $region28
      $region27: #{tpu_custom_call.1} parent=19 // pred_region
        %s188 = sadd.s32 %s18, %s19
        %s189 = smul.u32 2, %s188
        %p190 = scmp.lt.s32.totalorder %s189, 3
        %s191 = scalar_select %p190, %s189, 3
        %s192 = smul.addr %s191, 8
        %s193 = scalar_lea.vmem %s1, %s192
        %s194 = sadd.s32 %s18, %s19
        %s195 = smul.u32 2, %s194
      $region28: #{tpu_custom_call.1} parent=19 // pred_fallthru
        _
    $region20: #{tpu_custom_call.1} parent=5 // pred_fallthru
      _
    %p196 = scmp.le.s32.totalorder 1, %s11
    %p197 = scmp.lt.s32.totalorder %s11, 3
    %p198 = pnand %p196, %p197
    %p199 = pneg %p198
    // Predicated region
    $region29: #{tpu_custom_call.1} parent=5 // pred_check
      _
    $region30: #{tpu_custom_call.1} parent=5 // pred_check_branch
      %201 = sbr.rel (%p198) target = $region32
    $region31: #{tpu_custom_call.1} parent=5 // pred_region
      %s202 = ssub.s32 %s11, 1
      %s203 = sadd.s32 %s20, %s21
      %s204 = smul.u32 2, %s203
      %p205 = scmp.lt.s32.totalorder %s204, 3
      %s206 = scalar_select %p205, %s204, 3
      %s207 = smul.addr %s206, 8
      %s208 = scalar_lea.vmem %s0, %s207
      %p209 = pneg %p51
      %p210 = pneg %p48
      %s211 = sadd.s32 %s20, %s21
      %s212 = smul.u32 2, %s211
      %p213 = scmp.lt.s32.totalorder %s212, 3
      %s214 = scalar_select %p213, %s212, 3
      %s215 = smul.addr %s214, 8
      %s216 = scalar_lea.vmem %s1, %s215
      %p217 = pneg %p79
      %p218 = pneg %p76
      %p219 = pneg %p100
      %p220 = pneg %p97
      %p221 = pneg %p126
      %p222 = pneg %p123
      %p223 = scmp.lt.s32.totalorder %s20, 1
      %s224 = scalar_select %p223, %s20, 1
      %s225 = scalar_lea.vmem %s3, %s224
      %p226 = pneg %p152
      %p227 = pneg %p149
      %p228 = scmp.lt.s32.totalorder %s20, 1
      %s229 = scalar_select %p228, %s20, 1
      %s230 = scalar_lea.vmem %s4, %s229
      %s231 = sadd.s32 %s20, %s21
      %s232 = smul.u32 2, %s231
      %p233 = scmp.lt.s32.totalorder %s232, 3
      %s234 = scalar_select %p233, %s232, 3
      %s235 = smul.addr %s234, 8
      %s236 = scalar_lea.vmem %s0, %s235
      %s237 = sadd.s32 %s20, %s21
      %s238 = smul.u32 2, %s237
      %s239 = sadd.s32 %s20, %s21
      %s240 = smul.u32 2, %s239
      %p241 = scmp.lt.s32.totalorder %s240, 3
      %s242 = scalar_select %p241, %s240, 3
      %s243 = smul.addr %s242, 8
      %s244 = scalar_lea.vmem %s1, %s243
      %s245 = sadd.s32 %s20, %s21
      %s246 = smul.u32 2, %s245
      %p247 = scmp.lt.s32.totalorder %s20, 1
      %s248 = scalar_select %p247, %s20, 1
      %s249 = scalar_lea.vmem %s3, %s248
      %p250 = scmp.lt.s32.totalorder %s20, 1
      %s251 = scalar_select %p250, %s20, 1
      %s252 = scalar_lea.vmem %s4, %s251
      %p253 = scmp.eq.s32.totalorder %s21, 0
      // Predicated region
      $region33: #{tpu_custom_call.1} parent=31 // pred_check
        %p254 = pneg %p253
      $region34: #{tpu_custom_call.1} parent=31 // pred_check_branch
        %256 = sbr.rel (%p254) target = $region36
      $region35: #{tpu_custom_call.1} parent=31 // pred_region
        %vm257 = vcmask 0
        %258 = vst.msk [vmem:[%s249] sm:$0x1] %vm257, 0.0
        %259 = vst.msk [vmem:[%s252] sm:$0x1] %vm257, 0.0
      $region36: #{tpu_custom_call.1} parent=31 // pred_fallthru
        _
      %v260 = vld [vmem:[%s236] sm:$0xff]
      %v261 = vld [vmem:[%s236 + $0x8] sm:$0xff]
      %v262 = vld [vmem:[%s244] sm:$0xff]
      %v263 = vld [vmem:[%s244 + $0x8] sm:$0xff]
      %v264 = vld [vmem:[%s2] sm:$0x1]
      %vm265 = vcmp.ne.s32.totalorder %v262, 4294967196
      %vm266 = vcmp.ne.s32.totalorder %v263, 4294967196
      %v267 = vsel %vm265, 1, 0
      %v268 = vsel %vm266, 1, 0
      %v269 = vcvt.s32.f32 %v267
      %v270 = vcvt.s32.f32 %v268
      %v271 = vsel %vm265, %v262, 0
      %v272 = vsel %vm266, %v263, 0
      %v273 = vlaneseq
      %v274 = vand.u32 %v273, 127
      %275 = vset.pattern.permute.xlu0 0
      %276 = vperm.xlu0 %275, %v271
      %v277 = vpop.permute.xlu0 %276
      %278 = vset.pattern.permute.xlu0 0
      %279 = vperm.xlu0 %278, %v272
      %v280 = vpop.permute.xlu0 %279
      %vm281 = vcmp.eq.s32.totalorder %v274, %v277
      %vm282 = vcmp.eq.s32.totalorder %v274, %v280
      %v283 = vsel %vm281, 1, 0
      %v284 = vsel %vm282, 1, 0
      %v285 = vcvt.s32.f32 %v283
      %v286 = vcvt.s32.f32 %v284
      %vm287 = vcmask 130048
      %v288 = vsel %vm287, %v260, -inf
      %289 = vmax.xlane.f32.xlu0 %v288
      %v290 = vpop.xlane.xlu0 %289
      %v291 = vsel %vm287, %v261, -inf
      %292 = vmax.xlane.f32.xlu0 %v291
      %v293 = vpop.xlane.xlu0 %292
      %v294 = vsub.f32 %v260, %v290
      %v295 = vsub.f32 %v261, %v293
      %v296 = vmul.f32 %v294, 1.442695
      %v297 = vpow.pop %v296
      %v298 = vmul.f32 %v295, 1.442695
      %v299 = vpow.pop %v298
      %v300 = vsel %vm287, %v297, 0.0
      %301 = vadd.xlane.f32.xlu0 %v300
      %v302 = vpop.xlane.xlu0 %301
      %v303 = vsel %vm287, %v299, 0.0
      %304 = vadd.xlane.f32.xlu0 %v303
      %v305 = vpop.xlane.xlu0 %304
      %v306 = vlog2.pop %v302
      %v307 = vmul.f32 %v306, 0.6931472
      %v308 = vlog2.pop %v305
      %v309 = vmul.f32 %v308, 0.6931472
      %v310 = vmul.f32 %v285, %v260
      %v311 = vmul.f32 %v286, %v261
      %v312 = vsel %vm287, %v310, 0.0
      %313 = vadd.xlane.f32.xlu0 %v312
      %v314 = vpop.xlane.xlu0 %313
      %v315 = vsel %vm287, %v311, 0.0
      %316 = vadd.xlane.f32.xlu0 %v315
      %v317 = vpop.xlane.xlu0 %316
      %v318 = vsub.f32 %v314, %v290
      %v319 = vsub.f32 %v317, %v293
      %v320 = vsub.f32 %v318, %v307
      %v321 = vsub.f32 %v319, %v309
      %v322 = vmul.f32 %v320, 1.442695
      %v323 = vpow.pop %v322
      %v324 = vmul.f32 %v321, 1.442695
      %v325 = vpow.pop %v324
      %v326 = vmul.f32 %v323, %v269
      %v327 = vmul.f32 %v325, %v270
      %v328 = vsub.f32 1.0, %v326
      %v329 = vsub.f32 1.0, %v327
      %v330 = vadd.f32 %v326, 1e-16
      %v331 = vadd.f32 %v327, 1e-16
      %v332 = vlog2.pop %v330
      %v333 = vmul.f32 %v332, 0.6931472
      %v334 = vlog2.pop %v331
      %v335 = vmul.f32 %v334, 0.6931472
      %v336 = vsub.f32 0.0, %v333
      %v337 = vsub.f32 0.0, %v335
      %v338 = vsel %vm265, %v336, 0.0
      %v339 = vsel %vm266, %v337, 0.0
      %v341 = vlaneseq
      %v342 = vshrl.u32 %v341, 7
      %v343 = vsub.s32 0, %v342
      %v344 = vrot.slane %v264, %v343
      %v346 = vmul.f32 %v285, %v344
      %v347 = vmul.f32 %v286, %v344
      %v348 = vsel %vm287, %v346, 0.0
      %349 = vadd.xlane.f32.xlu0 %v348
      %v350 = vpop.xlane.xlu0 %349
      %v351 = vsel %vm287, %v347, 0.0
      %352 = vadd.xlane.f32.xlu0 %v351
      %v353 = vpop.xlane.xlu0 %352
      %v354 = vmul.f32 %v328, %v328
      %v355 = vmul.f32 %v329, %v329
      %v356 = vmul.f32 %v350, %v354
      %v357 = vmul.f32 %v353, %v355
      %v358 = vmul.f32 %v356, %v338
      %v359 = vmul.f32 %v357, %v339
      %v360 = vld [vmem:[%s249] sm:$0x1]
      %vm361 = vcmask 7168
      %v362 = vsel %vm361, %v358, 0.0
      %v363 = vsel %vm361, %v359, 0.0
      %v364 = vadd.f32 %v362, %v363
      %365 = vadd.xlane.f32.xlu0 %v364
      %v366 = vpop.xlane.xlu0 %365
      %v367 = vrot.slane %v366, 4
      %v368 = vadd.f32 %v366, %v367
      %v369 = vrot.slane %v368, 2
      %v370 = vadd.f32 %v368, %v369
      %v371 = vrot.slane %v370, 1
      %v372 = vadd.f32 %v370, %v371
      %s373 = vtos %v372
      %v374 = vstv %s373
      %v375 = vadd.f32 %v360, %v374
      %vm376 = vcmask 0
      %377 = vst.msk [vmem:[%s249] sm:$0x1] %vm376, %v375
      %v378 = vld [vmem:[%s252] sm:$0x1]
      %v379 = vmul.f32 %v269, %v350
      %v380 = vmul.f32 %v270, %v353
      %v381 = vsel %vm361, %v379, 0.0
      %v382 = vsel %vm361, %v380, 0.0
      %v383 = vadd.f32 %v381, %v382
      %384 = vadd.xlane.f32.xlu0 %v383
      %v385 = vpop.xlane.xlu0 %384
      %v386 = vrot.slane %v385, 4
      %v387 = vadd.f32 %v385, %v386
      %v388 = vrot.slane %v387, 2
      %v389 = vadd.f32 %v387, %v388
      %v390 = vrot.slane %v389, 1
      %v391 = vadd.f32 %v389, %v390
      %s392 = vtos %v391
      %v393 = vstv %s392
      %v394 = vadd.f32 %v378, %v393
      %395 = vst.msk [vmem:[%s252] sm:$0x1] %vm376, %v394
      %p396 = scmp.lt.s32.totalorder %s20, 1
      %s397 = scalar_select %p396, %s20, 1
      %s398 = scalar_lea.vmem %s3, %s397
      %p399 = scmp.lt.s32.totalorder %s20, 1
      %s400 = scalar_select %p399, %s20, 1
      %s401 = scalar_lea.vmem %s4, %s400
      // Predicated region
      $region37: #{tpu_custom_call.1} parent=31 // pred_check
        %p402 = pneg %p123
      $region38: #{tpu_custom_call.1} parent=31 // pred_check_branch
        %404 = sbr.rel (%p402) target = $region40
      $region39: #{tpu_custom_call.1} parent=31 // pred_region
        _
      $region40: #{tpu_custom_call.1} parent=31 // pred_fallthru
        _
      // Predicated region
      $region41: #{tpu_custom_call.1} parent=31 // pred_check
        %p405 = pneg %p149
      $region42: #{tpu_custom_call.1} parent=31 // pred_check_branch
        %407 = sbr.rel (%p405) target = $region44
      $region43: #{tpu_custom_call.1} parent=31 // pred_region
        _
      $region44: #{tpu_custom_call.1} parent=31 // pred_fallthru
        _
    $region32: #{tpu_custom_call.1} parent=5 // pred_fallthru
      _
    %p408 = scmp.le.s32.totalorder 2, %s11
    // Predicated region
    $region45: #{tpu_custom_call.1} parent=5 // pred_check
      %p409 = pneg %p408
    $region46: #{tpu_custom_call.1} parent=5 // pred_check_branch
      %411 = sbr.rel (%p409) target = $region48
    $region47: #{tpu_custom_call.1} parent=5 // pred_region
      %s412 = ssub.s32 %s11, 2
      // Predicated region
      $region49: #{tpu_custom_call.1} parent=47 // pred_check
        %p413 = pneg %p129
      $region50: #{tpu_custom_call.1} parent=47 // pred_check_branch
        %415 = sbr.rel (%p413) target = $region52
      $region51: #{tpu_custom_call.1} parent=47 // pred_region
        %p416 = scmp.lt.s32.totalorder %s22, 1
        %s417 = scalar_select %p416, %s22, 1
        %s418 = scalar_lea.vmem %s3, %s417
      $region52: #{tpu_custom_call.1} parent=47 // pred_fallthru
        _
      // Predicated region
      $region53: #{tpu_custom_call.1} parent=47 // pred_check
        %p419 = pneg %p155
      $region54: #{tpu_custom_call.1} parent=47 // pred_check_branch
        %421 = sbr.rel (%p419) target = $region56
      $region55: #{tpu_custom_call.1} parent=47 // pred_region
        %p422 = scmp.lt.s32.totalorder %s22, 1
        %s423 = scalar_select %p422, %s22, 1
        %s424 = scalar_lea.vmem %s4, %s423
      $region56: #{tpu_custom_call.1} parent=47 // pred_fallthru
        _
    $region48: #{tpu_custom_call.1} parent=5 // pred_fallthru
      _
  $region6: #{tpu_custom_call.1} parent=0 // loop_footer
    %s15 = sadd.s32 1, %s11
  $region7: #{tpu_custom_call.1} parent=0 // loop_footer_branch
    %10 = sbr.rel target = $region3
  $region8: #{tpu_custom_call.1} parent=0 // loop_exit
    _

</llo_original>
